<compile_context>
chip_gen: v6e
topology: v6e:2x2x1
jax: 0.10.0
libtpu: 0.0.40
codegen_flags: <defaults>
</compile_context>

<pallas_src>
import jax
import jax.numpy as jnp
from jax import lax
from jax.experimental import pallas as pl
from jax.experimental.pallas import tpu as pltpu


def convq_kernel(b_ref, w1p_ref, w2c_ref, xpc_ref, xcp_ref, o_ref):
    # b_ref  : SMEM (2,)          -- [b1, b2]
    # w1p_ref: VMEM (1, 1, 16)    -- [w1 || w1] (shared conv1 multiply, even|odd)
    # w2c_ref: VMEM (1, 8, 1)     -- w2 as a sublane column (conv2 sublane-reduce)
    # xpc_ref: VMEM (TB, 32, 16)  -- [t, r, parity*8 + ch] = x[t, ch, pixel 2r+parity]
    # xcp_ref: VMEM (TB, 8, 64)   -- [t, ch, pixel]
    # o_ref  : VMEM (TB, 32, 128) -- lane-dense output block
    tb = o_ref.shape[0]
    ch = 8 if tb % 8 == 0 else tb        # inner batch chunk: keep temporaries in vregs
    n_inner = tb // ch

    b1 = b_ref[0]
    b2 = b_ref[1]
    w1p = w1p_ref[...]                   # (1, 1, 16)
    w2c = w2c_ref[...]                   # (1, 8, 1)
    # Constant half-lane select mask, hoisted out of the inner loop.
    lane = lax.broadcasted_iota(jnp.int32, (1, 1, 128), 2)
    lo_half = lane < 64

    def body(t, carry):
        i0 = t * ch
        xpc = xpc_ref[pl.ds(i0, ch)]                                 # (ch, 32, 16)
        xcp = xcp_ref[pl.ds(i0, ch)]                                 # (ch, 8, 64)

        # conv1: one shared multiply over the [even|odd] slab, two 8-lane sums.
        prod = xpc * w1p
        e = jnp.sum(prod[:, :, 0:8], axis=2, keepdims=True) + b1    # v1 @ even pixels
        o = jnp.sum(prod[:, :, 8:16], axis=2, keepdims=True) + b1   # v1 @ odd pixels

        # conv2: broadcast multiply + sublane reduce, pixels stay on lanes.
        v2 = jnp.sum(xcp * w2c, axis=1, keepdims=True) + b2          # (ch, 1, 64)
        v2full = jnp.concatenate([v2, v2], axis=-1)                  # (ch, 1, 128)

        # Outer product as one full-width (unmasked) 128-lane store:
        #   lanes [0,64)  -> i = 2r (even)   lanes [64,128) -> i = 2r+1 (odd)
        v1full = jnp.where(lo_half, e, o)                            # (ch, 32, 128)
        o_ref[pl.ds(i0, ch)] = (v1full * v2full).astype(o_ref.dtype)
        return carry

    lax.fori_loop(0, n_inner, body, 0)


def conv_qnet_forward(x_nchw, w1, b1, w2, b2, *, block_b=128):
    """ConvQNet forward. x_nchw: (B, 8, 8, 8). Returns (B, 4096) float32.

    w1, w2: (8,) flattened Conv2d(8,1,1) weights; b1, b2: scalar biases.
    """
    B, C, H, W = x_nchw.shape
    assert (C, H, W) == (8, 8, 8), "ConvQNet expects (B, 8, 8, 8) inputs"

    x = x_nchw.astype(jnp.float32)

    # Cap the batch tile at ceil(B/2) so the grid has >= 2 steps whenever B > 1
    # (lets megacore parts shard the "parallel" batch axis across TensorCores).
    TB = min(block_b, max(1, pl.cdiv(B, 2))) if B > 1 else 1
    nb = pl.cdiv(B, TB)
    B_pad = nb * TB
    if B_pad != B:
        # Only pays an extra HBM pass when B % TB != 0.
        x = jnp.pad(x, ((0, B_pad - B), (0, 0), (0, 0), (0, 0)))

    # Wrapper-side layout plumbing (cheap vs the 16 KB/element output):
    #   x_cp[b, c, p]            = x[b, c, p]         (pure reshape, free)
    #   x_pc[b, r, parity*8 + c] = x[b, c, 2r+parity] (one small transpose)
    x_cp = x.reshape(B_pad, 8, 64)
    x_pc = jnp.transpose(x, (0, 2, 3, 1)).reshape(B_pad, 32, 16)

    b = jnp.stack([b1, b2]).astype(jnp.float32)                       # (2,) -> SMEM
    w1pair = jnp.concatenate([w1, w1]).astype(jnp.float32).reshape(1, 1, 16)
    w2col = w2.astype(jnp.float32).reshape(1, 8, 1)

    out = pl.pallas_call(
        convq_kernel,
        out_shape=jax.ShapeDtypeStruct((B_pad, 32, 128), jnp.float32),
        grid_spec=pltpu.PrefetchScalarGridSpec(
            num_scalar_prefetch=0,
            grid=(nb,),
            in_specs=[
                pl.BlockSpec(memory_space=pltpu.MemorySpace.SMEM),    # b  (2,)
                pl.BlockSpec((1, 1, 16), lambda g: (0, 0, 0)),        # [w1||w1]
                pl.BlockSpec((1, 8, 1), lambda g: (0, 0, 0)),         # w2 column
                pl.BlockSpec((TB, 32, 16), lambda g: (g, 0, 0)),      # x_pc
                pl.BlockSpec((TB, 8, 64), lambda g: (g, 0, 0)),       # x_cp
            ],
            out_specs=pl.BlockSpec((TB, 32, 128), lambda g: (g, 0, 0)),
        ),
        compiler_params=pltpu.CompilerParams(
            dimension_semantics=("parallel",),        # shard batch on megacore
            vmem_limit_bytes=32 * 1024 * 1024,        # headroom up to block_b=256
        ),
    )(b, w1pair, w2col, x_pc, x_cp)

    out = out.reshape(B_pad, 64 * 64)   # byte-identical to torch's .view(B, -1)
    if B_pad != B:
        out = out[:B]
    return out


def reference_forward(x_nchw, w1, b1, w2, b2):
    """Pure-JAX reference mirroring the PyTorch forward (float32)."""
    B = x_nchw.shape[0]
    x = x_nchw.astype(jnp.float32)
    v1 = jnp.einsum("bchw,c->bhw", x, w1).reshape(B, 64) + b1
    v2 = jnp.einsum("bchw,c->bhw", x, w2).reshape(B, 64) + b2
    return (v1[:, :, None] * v2[:, None, :]).reshape(B, 4096)


if __name__ == "__main__":
    key = jax.random.PRNGKey(0)
    kx, kw1, kb1, kw2, kb2, kx2 = jax.random.split(key, 6)

    # Conv2d(8, 1, kernel_size=1): weight (1, 8, 1, 1) -> (8,), bias (1,) -> scalar.
    w1 = jax.random.normal(kw1, (8,), dtype=jnp.float32) * 0.1
    b1 = jax.random.normal(kb1, (), dtype=jnp.float32) * 0.1
    w2 = jax.random.normal(kw2, (8,), dtype=jnp.float32) * 0.1
    b2 = jax.random.normal(kb2, (), dtype=jnp.float32) * 0.1

    # Small batch: exercises batch padding + the >=2-step grid heuristic.
    B = 5
    x = jax.random.normal(kx, (B, 8, 8, 8), dtype=jnp.float32)
    ref = reference_forward(x, w1, b1, w2, b2)
    out = jax.block_until_ready(conv_qnet_forward(x, w1, b1, w2, b2))
    assert out.shape == (B, 4096), out.shape
    assert jnp.allclose(out, ref, atol=1e-5, rtol=1e-5), "mismatch (default tiling)"

    # Tiny block size: multi-step grid + padding + single-chunk inner loop.
    out2 = jax.block_until_ready(conv_qnet_forward(x, w1, b1, w2, b2, block_b=2))
    assert jnp.allclose(out2, ref, atol=1e-5, rtol=1e-5), "mismatch (block_b=2)"

    # Batch divisible by 8: exercises the 8-row inner chunk loop (n_inner > 1).
    B3 = 32
    x3 = jax.random.normal(kx2, (B3, 8, 8, 8), dtype=jnp.float32)
    ref3 = reference_forward(x3, w1, b1, w2, b2)
    out3 = jax.block_until_ready(conv_qnet_forward(x3, w1, b1, w2, b2))
    assert out3.shape == (B3, 4096), out3.shape
    assert jnp.allclose(out3, ref3, atol=1e-5, rtol=1e-5), "mismatch (B=32)"

    print("KERNEL_OK")
</pallas_src>

<mosaic_0001>
module attributes {stable_mosaic.version = 11 : i64} {
  func.func @convq_kernel(%arg0: i32, %arg1: memref<2xf32, #tpu.memory_space<smem>>, %arg2: memref<1x1x16xf32, #tpu.memory_space<vmem>>, %arg3: memref<1x8x1xf32, #tpu.memory_space<vmem>>, %arg4: memref<3x32x16xf32, #tpu.memory_space<vmem>>, %arg5: memref<3x8x64xf32, #tpu.memory_space<vmem>>, %arg6: memref<3x32x128xf32, #tpu.memory_space<vmem>>) attributes {dimension_semantics = [#tpu.dimension_semantics<parallel>], iteration_bounds = array<i64: 2>, scalar_prefetch = 0 : i64, scratch_operands = 0 : i64, tpu.core_type = #tpu.core_type<tc>, window_params = [{transform_indices = @transform_0, window_bounds = array<i64: 2>}, {pipeline_mode = #tpu.pipeline_mode<synchronous>, transform_indices = @transform_1, window_bounds = array<i64: 1, 1, 16>}, {pipeline_mode = #tpu.pipeline_mode<synchronous>, transform_indices = @transform_2, window_bounds = array<i64: 1, 8, 1>}, {transform_indices = @transform_3, window_bounds = array<i64: 3, 32, 16>}, {transform_indices = @transform_4, window_bounds = array<i64: 3, 8, 64>}, {transform_indices = @transform_5, window_bounds = array<i64: 3, 32, 128>}]} {
    %c0 = arith.constant 0 : index
    %0 = memref.load %arg1[%c0] : memref<2xf32, #tpu.memory_space<smem>>
    %c1 = arith.constant 1 : index
    %1 = memref.load %arg1[%c1] : memref<2xf32, #tpu.memory_space<smem>>
    %c0_0 = arith.constant 0 : index
    %c0_1 = arith.constant 0 : index
    %c0_2 = arith.constant 0 : index
    %2 = vector.load %arg2[%c0_0, %c0_1, %c0_2] : memref<1x1x16xf32, #tpu.memory_space<vmem>>, vector<1x1x16xf32>
    %c0_3 = arith.constant 0 : index
    %c0_4 = arith.constant 0 : index
    %c0_5 = arith.constant 0 : index
    %3 = vector.load %arg3[%c0_3, %c0_4, %c0_5] : memref<1x8x1xf32, #tpu.memory_space<vmem>>, vector<1x8x1xf32>
    %4 = tpu.iota {dimensions = array<i32: 2>} : vector<1x1x128xi32>
    %c64_i32 = arith.constant 64 : i32
    %5 = vector.broadcast %c64_i32 : i32 to vector<1x1x128xi32>
    %6 = arith.cmpi slt, %4, %5 : vector<1x1x128xi32>
    %c0_i32 = arith.constant 0 : i32
    %c3_i32 = arith.constant 3 : i32
    %7 = arith.muli %c0_i32, %c3_i32 : i32
    %8 = arith.index_cast %7 : i32 to index
    %c0_6 = arith.constant 0 : index
    %c0_7 = arith.constant 0 : index
    %9 = vector.load %arg4[%8, %c0_6, %c0_7] : memref<3x32x16xf32, #tpu.memory_space<vmem>>, vector<3x32x16xf32>
    %10 = arith.index_cast %7 : i32 to index
    %c0_8 = arith.constant 0 : index
    %c0_9 = arith.constant 0 : index
    %11 = vector.load %arg5[%10, %c0_8, %c0_9] : memref<3x8x64xf32, #tpu.memory_space<vmem>>, vector<3x8x64xf32>
    %12 = vector.broadcast %2 : vector<1x1x16xf32> to vector<3x32x16xf32>
    %13 = arith.mulf %9, %12 : vector<3x32x16xf32>
    %14 = vector.extract_strided_slice %13 {offsets = [0, 0, 0], sizes = [3, 32, 8], strides = [1, 1, 1]} : vector<3x32x16xf32> to vector<3x32x8xf32>
    %cst = arith.constant dense<0.000000e+00> : vector<3x32xf32>
    %15 = vector.multi_reduction <add>, %14, %cst [2] : vector<3x32x8xf32> to vector<3x32xf32>
    %16 = vector.shape_cast %15 : vector<3x32xf32> to vector<3x32x1xf32>
    %17 = vector.broadcast %0 : f32 to vector<3x32x1xf32>
    %18 = arith.addf %16, %17 : vector<3x32x1xf32>
    %19 = vector.extract_strided_slice %13 {offsets = [0, 0, 8], sizes = [3, 32, 8], strides = [1, 1, 1]} : vector<3x32x16xf32> to vector<3x32x8xf32>
    %cst_10 = arith.constant dense<0.000000e+00> : vector<3x32xf32>
    %20 = vector.multi_reduction <add>, %19, %cst_10 [2] : vector<3x32x8xf32> to vector<3x32xf32>
    %21 = vector.shape_cast %20 : vector<3x32xf32> to vector<3x32x1xf32>
    %22 = vector.broadcast %0 : f32 to vector<3x32x1xf32>
    %23 = arith.addf %21, %22 : vector<3x32x1xf32>
    %24 = vector.broadcast %3 : vector<1x8x1xf32> to vector<3x8x64xf32>
    %25 = arith.mulf %11, %24 : vector<3x8x64xf32>
    %cst_11 = arith.constant dense<0.000000e+00> : vector<3x64xf32>
    %26 = vector.multi_reduction <add>, %25, %cst_11 [1] : vector<3x8x64xf32> to vector<3x64xf32>
    %27 = vector.shape_cast %26 : vector<3x64xf32> to vector<3x1x64xf32>
    %28 = vector.broadcast %1 : f32 to vector<3x1x64xf32>
    %29 = arith.addf %27, %28 : vector<3x1x64xf32>
    %30 = tpu.concatenate %29, %29 in 2 : vector<3x1x64xf32>, vector<3x1x64xf32> -> vector<3x1x128xf32>
    %31 = vector.shape_cast %6 : vector<1x1x128xi1> to vector<1x1x128xi1>
    %32 = vector.broadcast %31 : vector<1x1x128xi1> to vector<3x32x128xi1>
    %33 = vector.shape_cast %18 : vector<3x32x1xf32> to vector<3x32x1xf32>
    %34 = vector.broadcast %33 : vector<3x32x1xf32> to vector<3x32x128xf32>
    %35 = vector.shape_cast %23 : vector<3x32x1xf32> to vector<3x32x1xf32>
    %36 = vector.broadcast %35 : vector<3x32x1xf32> to vector<3x32x128xf32>
    %37 = arith.select %32, %34, %36 : vector<3x32x128xi1>, vector<3x32x128xf32>
    %38 = vector.broadcast %30 : vector<3x1x128xf32> to vector<3x32x128xf32>
    %39 = arith.mulf %37, %38 : vector<3x32x128xf32>
    %40 = arith.index_cast %7 : i32 to index
    %c0_12 = arith.constant 0 : index
    %c0_13 = arith.constant 0 : index
    %41 = vector.load %arg6[%40, %c0_12, %c0_13] : memref<3x32x128xf32, #tpu.memory_space<vmem>>, vector<3x32x128xf32>
    tpu.vector_store %arg6[%40, %c0_12, %c0_13], %39 {strides = array<i32>} : memref<3x32x128xf32, #tpu.memory_space<vmem>>, vector<3x32x128xf32>,
    %c1_i32 = arith.constant 1 : i32
    return
  }
  func.func @transform_0(%arg0: i32) -> i32 {
    %c0_i32 = arith.constant 0 : i32
    %c0_i32_0 = arith.constant 0 : i32
    return %c0_i32 : i32
  }
  func.func @transform_1(%arg0: i32) -> (i32, i32, i32) {
    %c0_i32 = arith.constant 0 : i32
    %c0_i32_0 = arith.constant 0 : i32
    %c0_i32_1 = arith.constant 0 : i32
    %c0_i32_2 = arith.constant 0 : i32
    return %c0_i32, %c0_i32_0, %c0_i32_1 : i32, i32, i32
  }
  func.func @transform_2(%arg0: i32) -> (i32, i32, i32) {
    %c0_i32 = arith.constant 0 : i32
    %c0_i32_0 = arith.constant 0 : i32
    %c0_i32_1 = arith.constant 0 : i32
    %c0_i32_2 = arith.constant 0 : i32
    return %c0_i32, %c0_i32_0, %c0_i32_1 : i32, i32, i32
  }
  func.func @transform_3(%arg0: i32) -> (i32, i32, i32) {
    %c0_i32 = arith.constant 0 : i32
    %c0_i32_0 = arith.constant 0 : i32
    %c0_i32_1 = arith.constant 0 : i32
    return %arg0, %c0_i32, %c0_i32_0 : i32, i32, i32
  }
  func.func @transform_4(%arg0: i32) -> (i32, i32, i32) {
    %c0_i32 = arith.constant 0 : i32
    %c0_i32_0 = arith.constant 0 : i32
    %c0_i32_1 = arith.constant 0 : i32
    return %arg0, %c0_i32, %c0_i32_0 : i32, i32, i32
  }
  func.func @transform_5(%arg0: i32) -> (i32, i32, i32) {
    %c0_i32 = arith.constant 0 : i32
    %c0_i32_0 = arith.constant 0 : i32
    %c0_i32_1 = arith.constant 0 : i32
    return %arg0, %c0_i32, %c0_i32_0 : i32, i32, i32
  }
}

</mosaic_0001>

<llo_original>
// kernel: tpu_custom_call.1
$region0: #{tpu_custom_call.1}
  #allocation0 [shape = 'u32[]', space=smem, size = 0x4, offset = 0x4, fixed_abs, tag = 'smem constant byte address 0x4 - core index']
  #allocation1 [shape = 'u32[144,128]{1,0:T(1,128)}', space=vmem, size = 0x12000, scoped, tag = 'internal scratch']
  %s0 = inlined_call_operand.vmem [shape: f32[2], index: 0, kind: input, shape index: {}]
  %s1 = inlined_call_operand.vmem [shape: f32[1,1,16], index: 1, kind: input, shape index: {}]
  %s2 = inlined_call_operand.vmem [shape: f32[1,8,1], index: 2, kind: input, shape index: {}]
  %s3 = inlined_call_operand.vmem [shape: f32[6,32,16], index: 3, kind: input, shape index: {}]
  %s4 = inlined_call_operand.vmem [shape: f32[6,8,64], index: 4, kind: input, shape index: {}]
  %s5 = inlined_call_operand.hbm [shape: f32[6,32,128], index: 5, kind: output, shape index: {}]
  %s6 = sld [smem:[#allocation0]]
  $region57: #{tpu_custom_call.1} parent=0
    _
  %s8 = ssub.s32 1, %s6
  %s9 = scalar_select 0, %s8, %s6
  $region1: #{tpu_custom_call.1} parent=0
    #allocation2 [shape = 'u8[512]{0}', space=smem, size = 0x200, scoped, tag = 'input window, operand 0, single buffered']
    #allocation3 [shape = 's32[2]{0}', space=sflag, size = 0x8, scoped, tag = 'scoped memory for tpu_custom_call.1']
    #allocation4 [shape = 's32[2]{0}', space=sflag, size = 0x8, scoped, tag = 'scoped memory for tpu_custom_call.1']
    #allocation5 [shape = 'u8[98304]{0}', space=vmem, size = 0x18000, scoped, tag = 'output window, operand 0']
    %10 = vsyncpa [#allocation4], 0
    %11 = vsyncpa [#allocation3], 0
    %s12 = scalar_lea.sflag [#allocation3], 1
    %13 = vsyncpa %s12, 0
    loop: start=0, step=1, limit=4
    $region2: #{tpu_custom_call.1} parent=1 // loop_pre_header
      _
    $region3: #{tpu_custom_call.1} parent=1 // loop_header
      %s15 = sphi 0, %s19
      %p16 = scmp.ge.s32.totalorder %s15, 4
      %s23 = sphi 0, %s23
      %s25 = sphi 0, %s23
      %s26 = sphi 0, %s25
      %s40 = sphi 0, %s26
      %s44 = sphi 0, %s44
      %s46 = sphi 0, %s44
      %s47 = sphi 0, %s46
      %s61 = sphi 0, %s47
      %s65 = sphi 0, %s65
      %s67 = sphi 0, %s65
      %s68 = sphi 0, %s67
      %s82 = sphi 0, %s68
      %s88 = sphi 0, %s90
      %s91 = sphi 0, %s88
      %s92 = sphi 0, %s91
      %s108 = sphi 0, %s92
      %s114 = sphi 0, %s116
      %s117 = sphi 0, %s114
      %s118 = sphi 0, %s117
      %s134 = sphi 0, %s118
      %s140 = sphi 0, %s142
      %s143 = sphi 0, %s140
      %s144 = sphi 0, %s143
      %s160 = sphi 0, %s144
    $region4: #{tpu_custom_call.1} parent=1 // loop_header_branch
      %18 = sbr.rel (%p16) target = $region8
    $region5: #{tpu_custom_call.1} parent=1 // loop_body
      %s20 = ssub.s32 %s15, 1
      %s21 = ssub.s32 %s15, 2
      %s22 = sadd.s32 %s15, 1
      %s24 = sadd.s32 %s23, 1
      %p27 = scmp.eq.s32.totalorder %s15, 1
      %p28 = scmp.ne.s32.totalorder %s23, %s25
      %p29 = scmp.eq.s32.totalorder %s15, 0
      %p30 = por %p28, %p29
      %p31 = scmp.ne.s32.totalorder %s23, %s25
      %p32 = scmp.eq.s32.totalorder %s20, 1
      %p33 = por %p31, %p32
      %p34 = scmp.ne.s32.totalorder %s25, %s26
      %p35 = scmp.eq.s32.totalorder %s20, 0
      %p36 = por %p34, %p35
      %p37 = scmp.ne.s32.totalorder %s25, %s26
      %p38 = scmp.eq.s32.totalorder %s21, 1
      %p39 = por %p37, %p38
      %p41 = scmp.ne.s32.totalorder %s26, %s40
      %p42 = scmp.eq.s32.totalorder %s21, 0
      %p43 = por %p41, %p42
      %s45 = sadd.s32 %s44, 1
      %p48 = scmp.eq.s32.totalorder %s15, 1
      %p49 = scmp.ne.s32.totalorder %s44, %s46
      %p50 = scmp.eq.s32.totalorder %s15, 0
      %p51 = por %p49, %p50
      %p52 = scmp.ne.s32.totalorder %s44, %s46
      %p53 = scmp.eq.s32.totalorder %s20, 1
      %p54 = por %p52, %p53
      %p55 = scmp.ne.s32.totalorder %s46, %s47
      %p56 = scmp.eq.s32.totalorder %s20, 0
      %p57 = por %p55, %p56
      %p58 = scmp.ne.s32.totalorder %s46, %s47
      %p59 = scmp.eq.s32.totalorder %s21, 1
      %p60 = por %p58, %p59
      %p62 = scmp.ne.s32.totalorder %s47, %s61
      %p63 = scmp.eq.s32.totalorder %s21, 0
      %p64 = por %p62, %p63
      %s66 = sadd.s32 %s65, 1
      %p69 = scmp.eq.s32.totalorder %s15, 1
      %p70 = scmp.ne.s32.totalorder %s65, %s67
      %p71 = scmp.eq.s32.totalorder %s15, 0
      %p72 = por %p70, %p71
      %p73 = scmp.ne.s32.totalorder %s65, %s67
      %p74 = scmp.eq.s32.totalorder %s20, 1
      %p75 = por %p73, %p74
      %p76 = scmp.ne.s32.totalorder %s67, %s68
      %p77 = scmp.eq.s32.totalorder %s20, 0
      %p78 = por %p76, %p77
      %p79 = scmp.ne.s32.totalorder %s67, %s68
      %p80 = scmp.eq.s32.totalorder %s21, 1
      %p81 = por %p79, %p80
      %p83 = scmp.ne.s32.totalorder %s68, %s82
      %p84 = scmp.eq.s32.totalorder %s21, 0
      %p85 = por %p83, %p84
      %s86 = ssub.s32 %s15, %s22
      %p87 = scmp.eq.s32.totalorder %s86, 0
      %s89 = sadd.s32 %s88, 1
      %s90 = scalar_select %p87, %s88, %s89
      %p93 = pneg %p87
      %p94 = scmp.eq.s32.totalorder %s15, 1
      %p95 = por %p93, %p94
      %p96 = scmp.ne.s32.totalorder %s88, %s91
      %p97 = scmp.eq.s32.totalorder %s15, 0
      %p98 = por %p96, %p97
      %p99 = scmp.ne.s32.totalorder %s88, %s91
      %p100 = scmp.eq.s32.totalorder %s20, 1
      %p101 = por %p99, %p100
      %p102 = scmp.ne.s32.totalorder %s91, %s92
      %p103 = scmp.eq.s32.totalorder %s20, 0
      %p104 = por %p102, %p103
      %p105 = scmp.ne.s32.totalorder %s91, %s92
      %p106 = scmp.eq.s32.totalorder %s21, 1
      %p107 = por %p105, %p106
      %p109 = scmp.ne.s32.totalorder %s92, %s108
      %p110 = scmp.eq.s32.totalorder %s21, 0
      %p111 = por %p109, %p110
      %s112 = ssub.s32 %s15, %s22
      %p113 = scmp.eq.s32.totalorder %s112, 0
      %s115 = sadd.s32 %s114, 1
      %s116 = scalar_select %p113, %s114, %s115
      %p119 = pneg %p113
      %p120 = scmp.eq.s32.totalorder %s15, 1
      %p121 = por %p119, %p120
      %p122 = scmp.ne.s32.totalorder %s114, %s117
      %p123 = scmp.eq.s32.totalorder %s15, 0
      %p124 = por %p122, %p123
      %p125 = scmp.ne.s32.totalorder %s114, %s117
      %p126 = scmp.eq.s32.totalorder %s20, 1
      %p127 = por %p125, %p126
      %p128 = scmp.ne.s32.totalorder %s117, %s118
      %p129 = scmp.eq.s32.totalorder %s20, 0
      %p130 = por %p128, %p129
      %p131 = scmp.ne.s32.totalorder %s117, %s118
      %p132 = scmp.eq.s32.totalorder %s21, 1
      %p133 = por %p131, %p132
      %p135 = scmp.ne.s32.totalorder %s118, %s134
      %p136 = scmp.eq.s32.totalorder %s21, 0
      %p137 = por %p135, %p136
      %s138 = ssub.s32 %s15, %s22
      %p139 = scmp.eq.s32.totalorder %s138, 0
      %s141 = sadd.s32 %s140, 1
      %s142 = scalar_select %p139, %s140, %s141
      %p145 = pneg %p139
      %p146 = scmp.eq.s32.totalorder %s15, 1
      %p147 = por %p145, %p146
      %p148 = scmp.ne.s32.totalorder %s140, %s143
      %p149 = scmp.eq.s32.totalorder %s15, 0
      %p150 = por %p148, %p149
      %p151 = scmp.ne.s32.totalorder %s140, %s143
      %p152 = scmp.eq.s32.totalorder %s20, 1
      %p153 = por %p151, %p152
      %p154 = scmp.ne.s32.totalorder %s143, %s144
      %p155 = scmp.eq.s32.totalorder %s20, 0
      %p156 = por %p154, %p155
      %p157 = scmp.ne.s32.totalorder %s143, %s144
      %p158 = scmp.eq.s32.totalorder %s21, 1
      %p159 = por %p157, %p158
      %p161 = scmp.ne.s32.totalorder %s144, %s160
      %p162 = scmp.eq.s32.totalorder %s21, 0
      %p163 = por %p161, %p162
      %p164 = scmp.le.s32.totalorder 1, %s15
      %p165 = scmp.lt.s32.totalorder %s15, 3
      %p166 = pnand %p164, %p165
      %p167 = pneg %p166
      // Predicated region
      $region9: #{tpu_custom_call.1} parent=5 // pred_check
        _
      $region10: #{tpu_custom_call.1} parent=5 // pred_check_branch
        %169 = sbr.rel (%p166) target = $region12
      $region11: #{tpu_custom_call.1} parent=5 // pred_region
        %s170 = ssub.s32 %s15, 1
        // Predicated region
        $region13: #{tpu_custom_call.1} parent=11 // pred_check
          %p171 = pneg %p36
        $region14: #{tpu_custom_call.1} parent=11 // pred_check_branch
          %173 = sbr.rel (%p171) target = $region16
        $region15: #{tpu_custom_call.1} parent=11 // pred_region
          %s175 = ssub.s32 16, 16
          %176 = vsyncadd [#allocation4], %s175
          %s178 = sshll.u32 %s0, 4
          %s179 = int_to_ptr.vmem [resolvable:$true] %s178
          %181 = dma.vmem_to_smem %s179, 16, [#allocation2], [#allocation4]
        $region16: #{tpu_custom_call.1} parent=11 // pred_fallthru
          _
        // Predicated region
        $region17: #{tpu_custom_call.1} parent=11 // pred_check
          %p182 = pneg %p57
        $region18: #{tpu_custom_call.1} parent=11 // pred_check_branch
          %184 = sbr.rel (%p182) target = $region20
        $region19: #{tpu_custom_call.1} parent=11 // pred_region
          _
        $region20: #{tpu_custom_call.1} parent=11 // pred_fallthru
          _
        // Predicated region
        $region21: #{tpu_custom_call.1} parent=11 // pred_check
          %p185 = pneg %p78
        $region22: #{tpu_custom_call.1} parent=11 // pred_check_branch
          %187 = sbr.rel (%p185) target = $region24
        $region23: #{tpu_custom_call.1} parent=11 // pred_region
          _
        $region24: #{tpu_custom_call.1} parent=11 // pred_fallthru
          _
      $region12: #{tpu_custom_call.1} parent=5 // pred_fallthru
        _
      %p188 = scmp.lt.s32.totalorder %s15, 2
      // Predicated region
      $region25: #{tpu_custom_call.1} parent=5 // pred_check
        %p189 = pneg %p188
      $region26: #{tpu_custom_call.1} parent=5 // pred_check_branch
        %191 = sbr.rel (%p189) target = $region28
      $region27: #{tpu_custom_call.1} parent=5 // pred_region
        // Predicated region
        $region29: #{tpu_custom_call.1} parent=27 // pred_check
          %p192 = pneg %p98
        $region30: #{tpu_custom_call.1} parent=27 // pred_check_branch
          %194 = sbr.rel (%p192) target = $region32
        $region31: #{tpu_custom_call.1} parent=27 // pred_region
          %s195 = smul.u32 3, %s15
          %p196 = scmp.lt.s32.totalorder %s195, 5
          %s197 = scalar_select %p196, %s195, 5
          %s198 = smul.addr %s197, 4
          %s199 = smul.addr %s198, 8
          %s200 = scalar_lea.vmem %s3, %s199
          %s201 = smul.u32 3, %s15
        $region32: #{tpu_custom_call.1} parent=27 // pred_fallthru
          _
        // Predicated region
        $region33: #{tpu_custom_call.1} parent=27 // pred_check
          %p202 = pneg %p124
        $region34: #{tpu_custom_call.1} parent=27 // pred_check_branch
          %204 = sbr.rel (%p202) target = $region36
        $region35: #{tpu_custom_call.1} parent=27 // pred_region
          %s205 = smul.u32 3, %s15
          %p206 = scmp.lt.s32.totalorder %s205, 5
          %s207 = scalar_select %p206, %s205, 5
          %s208 = smul.addr %s207, 8
          %s209 = scalar_lea.vmem %s4, %s208
          %s210 = smul.u32 3, %s15
        $region36: #{tpu_custom_call.1} parent=27 // pred_fallthru
          _
      $region28: #{tpu_custom_call.1} parent=5 // pred_fallthru
        _
      %p211 = scmp.le.s32.totalorder 1, %s15
      %p212 = scmp.lt.s32.totalorder %s15, 3
      %p213 = pnand %p211, %p212
      %p214 = pneg %p213
      // Predicated region
      $region37: #{tpu_custom_call.1} parent=5 // pred_check
        _
      $region38: #{tpu_custom_call.1} parent=5 // pred_check_branch
        %216 = sbr.rel (%p213) target = $region40
      $region39: #{tpu_custom_call.1} parent=5 // pred_region
        %s217 = ssub.s32 %s15, 1
        // Predicated region
        $region41: #{tpu_custom_call.1} parent=39 // pred_check
          %p218 = pneg %p36
        $region42: #{tpu_custom_call.1} parent=39 // pred_check_branch
          %220 = sbr.rel (%p218) target = $region44
        $region43: #{tpu_custom_call.1} parent=39 // pred_region
          %221 = dma.done [#allocation4], 16
        $region44: #{tpu_custom_call.1} parent=39 // pred_fallthru
          _
        %222 = sfence
        %p223 = pneg %p36
        %p224 = pneg %p33
        %p225 = pneg %p57
        %p226 = pneg %p54
        %p227 = pneg %p78
        %p228 = pneg %p75
        %s229 = smul.u32 3, %s20
        %p230 = scmp.lt.s32.totalorder %s229, 5
        %s231 = scalar_select %p230, %s229, 5
        %s232 = smul.addr %s231, 4
        %s233 = smul.addr %s232, 8
        %s234 = scalar_lea.vmem %s3, %s233
        %p235 = pneg %p104
        %p236 = pneg %p101
        %s237 = smul.u32 3, %s20
        %p238 = scmp.lt.s32.totalorder %s237, 5
        %s239 = scalar_select %p238, %s237, 5
        %s240 = smul.addr %s239, 8
        %s241 = scalar_lea.vmem %s4, %s240
        %p242 = pneg %p130
        %p243 = pneg %p127
        %p244 = pneg %p156
        %p245 = pneg %p153
        %s246 = sand.u32 %s143, 1
        %s247 = scalar_lea.sflag [#allocation3], %s246
        %s248 = sand.u32 %s143, 1
        %s249 = smul.addr %s248, 96
        %s250 = scalar_lea.vmem [#allocation5], %s249
        %s251 = smul.u32 3, %s20
        %p252 = scmp.lt.s32.totalorder %s251, 5
        %s253 = scalar_select %p252, %s251, 5
        %s254 = smul.addr %s253, 4
        %s255 = smul.addr %s254, 8
        %s256 = scalar_lea.vmem %s3, %s255
        %s257 = smul.u32 3, %s20
        %s258 = smul.u32 3, %s20
        %p259 = scmp.lt.s32.totalorder %s258, 5
        %s260 = scalar_select %p259, %s258, 5
        %s261 = smul.addr %s260, 8
        %s262 = scalar_lea.vmem %s4, %s261
        %s263 = smul.u32 3, %s20
        %s264 = smul.u32 3, %s20
        %s265 = sld [smem:[#allocation2]]
        %s266 = sld [smem:[#allocation2 + $0x1]]
        %v267 = vld [vmem:[%s1] sm:$0x1]
        %v268 = vld [vmem:[%s2] sm:$0xff]
        %v269 = vlaneseq
        %v270 = vand.u32 %v269, 127
        %vm271 = vcmp.lt.s32.totalorder %v270, 64
        %v272 = vld [vmem:[%s256] sm:$0xff]
        %v273 = vld [vmem:[%s256 + $0x8] sm:$0xff]
        %v274 = vld [vmem:[%s256 + $0x10] sm:$0xff]
        %v275 = vld [vmem:[%s256 + $0x18] sm:$0xff]
        %v276 = vld [vmem:[%s256 + $0x20] sm:$0xff]
        %v277 = vld [vmem:[%s256 + $0x28] sm:$0xff]
        %v278 = vld [vmem:[%s256 + $0x30] sm:$0xff]
        %v279 = vld [vmem:[%s256 + $0x38] sm:$0xff]
        %v280 = vld [vmem:[%s256 + $0x40] sm:$0xff]
        %v281 = vld [vmem:[%s256 + $0x48] sm:$0xff]
        %v282 = vld [vmem:[%s256 + $0x50] sm:$0xff]
        %v283 = vld [vmem:[%s256 + $0x58] sm:$0xff]
        %v284 = vld [vmem:[%s262] sm:$0xff]
        %v285 = vld [vmem:[%s262 + $0x8] sm:$0xff]
        %v286 = vld [vmem:[%s262 + $0x10] sm:$0xff]
        %v288 = vlaneseq
        %v289 = vshrl.u32 %v288, 7
        %v290 = vsub.s32 0, %v289
        %v291 = vrot.slane %v267, %v290
        %v293 = vmul.f32 %v272, %v291
        %v294 = vmul.f32 %v273, %v291
        %v295 = vmul.f32 %v274, %v291
        %v296 = vmul.f32 %v275, %v291
        %v297 = vmul.f32 %v276, %v291
        %v298 = vmul.f32 %v277, %v291
        %v299 = vmul.f32 %v278, %v291
        %v300 = vmul.f32 %v279, %v291
        %v301 = vmul.f32 %v280, %v291
        %v302 = vmul.f32 %v281, %v291
        %v303 = vmul.f32 %v282, %v291
        %v304 = vmul.f32 %v283, %v291
        %vm305 = vcmask 64512
        %v306 = vsel %vm305, %v293, 0.0
        %307 = vadd.xlane.f32.xlu0 %v306
        %v308 = vpop.xlane.xlu0 %307
        %v309 = vsel %vm305, %v294, 0.0
        %310 = vadd.xlane.f32.xlu0 %v309
        %v311 = vpop.xlane.xlu0 %310
        %v312 = vsel %vm305, %v295, 0.0
        %313 = vadd.xlane.f32.xlu0 %v312
        %v314 = vpop.xlane.xlu0 %313
        %v315 = vsel %vm305, %v296, 0.0
        %316 = vadd.xlane.f32.xlu0 %v315
        %v317 = vpop.xlane.xlu0 %316
        %v318 = vsel %vm305, %v297, 0.0
        %319 = vadd.xlane.f32.xlu0 %v318
        %v320 = vpop.xlane.xlu0 %319
        %v321 = vsel %vm305, %v298, 0.0
        %322 = vadd.xlane.f32.xlu0 %v321
        %v323 = vpop.xlane.xlu0 %322
        %v324 = vsel %vm305, %v299, 0.0
        %325 = vadd.xlane.f32.xlu0 %v324
        %v326 = vpop.xlane.xlu0 %325
        %v327 = vsel %vm305, %v300, 0.0
        %328 = vadd.xlane.f32.xlu0 %v327
        %v329 = vpop.xlane.xlu0 %328
        %v330 = vsel %vm305, %v301, 0.0
        %331 = vadd.xlane.f32.xlu0 %v330
        %v332 = vpop.xlane.xlu0 %331
        %v333 = vsel %vm305, %v302, 0.0
        %334 = vadd.xlane.f32.xlu0 %v333
        %v335 = vpop.xlane.xlu0 %334
        %v336 = vsel %vm305, %v303, 0.0
        %337 = vadd.xlane.f32.xlu0 %v336
        %v338 = vpop.xlane.xlu0 %337
        %v339 = vsel %vm305, %v304, 0.0
        %340 = vadd.xlane.f32.xlu0 %v339
        %v341 = vpop.xlane.xlu0 %340
        %v342 = vstv %s265
        %v343 = vadd.f32 %v308, %v342
        %v344 = vadd.f32 %v311, %v342
        %v345 = vadd.f32 %v314, %v342
        %v346 = vadd.f32 %v317, %v342
        %v347 = vadd.f32 %v320, %v342
        %v348 = vadd.f32 %v323, %v342
        %v349 = vadd.f32 %v326, %v342
        %v350 = vadd.f32 %v329, %v342
        %v351 = vadd.f32 %v332, %v342
        %v352 = vadd.f32 %v335, %v342
        %v353 = vadd.f32 %v338, %v342
        %v354 = vadd.f32 %v341, %v342
        %367 = vrot.lane.b32.xlu0 %v293, 120
        %v368 = vpop.permute.xlu0 %367
        %369 = vrot.lane.b32.xlu0 %v294, 120
        %v370 = vpop.permute.xlu0 %369
        %371 = vrot.lane.b32.xlu0 %v295, 120
        %v372 = vpop.permute.xlu0 %371
        %373 = vrot.lane.b32.xlu0 %v296, 120
        %v374 = vpop.permute.xlu0 %373
        %375 = vrot.lane.b32.xlu0 %v297, 120
        %v376 = vpop.permute.xlu0 %375
        %377 = vrot.lane.b32.xlu0 %v298, 120
        %v378 = vpop.permute.xlu0 %377
        %379 = vrot.lane.b32.xlu0 %v299, 120
        %v380 = vpop.permute.xlu0 %379
        %381 = vrot.lane.b32.xlu0 %v300, 120
        %v382 = vpop.permute.xlu0 %381
        %383 = vrot.lane.b32.xlu0 %v301, 120
        %v384 = vpop.permute.xlu0 %383
        %385 = vrot.lane.b32.xlu0 %v302, 120
        %v386 = vpop.permute.xlu0 %385
        %387 = vrot.lane.b32.xlu0 %v303, 120
        %v388 = vpop.permute.xlu0 %387
        %389 = vrot.lane.b32.xlu0 %v304, 120
        %v390 = vpop.permute.xlu0 %389
        %v403 = vsel %vm305, %v368, 0.0
        %404 = vadd.xlane.f32.xlu0 %v403
        %v405 = vpop.xlane.xlu0 %404
        %v406 = vsel %vm305, %v370, 0.0
        %407 = vadd.xlane.f32.xlu0 %v406
        %v408 = vpop.xlane.xlu0 %407
        %v409 = vsel %vm305, %v372, 0.0
        %410 = vadd.xlane.f32.xlu0 %v409
        %v411 = vpop.xlane.xlu0 %410
        %v412 = vsel %vm305, %v374, 0.0
        %413 = vadd.xlane.f32.xlu0 %v412
        %v414 = vpop.xlane.xlu0 %413
        %v415 = vsel %vm305, %v376, 0.0
        %416 = vadd.xlane.f32.xlu0 %v415
        %v417 = vpop.xlane.xlu0 %416
        %v418 = vsel %vm305, %v378, 0.0
        %419 = vadd.xlane.f32.xlu0 %v418
        %v420 = vpop.xlane.xlu0 %419
        %v421 = vsel %vm305, %v380, 0.0
        %422 = vadd.xlane.f32.xlu0 %v421
        %v423 = vpop.xlane.xlu0 %422
        %v424 = vsel %vm305, %v382, 0.0
        %425 = vadd.xlane.f32.xlu0 %v424
        %v426 = vpop.xlane.xlu0 %425
        %v427 = vsel %vm305, %v384, 0.0
        %428 = vadd.xlane.f32.xlu0 %v427
        %v429 = vpop.xlane.xlu0 %428
        %v430 = vsel %vm305, %v386, 0.0
        %431 = vadd.xlane.f32.xlu0 %v430
        %v432 = vpop.xlane.xlu0 %431
        %v433 = vsel %vm305, %v388, 0.0
        %434 = vadd.xlane.f32.xlu0 %v433
        %v435 = vpop.xlane.xlu0 %434
        %v436 = vsel %vm305, %v390, 0.0
        %437 = vadd.xlane.f32.xlu0 %v436
        %v438 = vpop.xlane.xlu0 %437
        %v439 = vadd.f32 %v405, %v342
        %v440 = vadd.f32 %v408, %v342
        %v441 = vadd.f32 %v411, %v342
        %v442 = vadd.f32 %v414, %v342
        %v443 = vadd.f32 %v417, %v342
        %v444 = vadd.f32 %v420, %v342
        %v445 = vadd.f32 %v423, %v342
        %v446 = vadd.f32 %v426, %v342
        %v447 = vadd.f32 %v429, %v342
        %v448 = vadd.f32 %v432, %v342
        %v449 = vadd.f32 %v435, %v342
        %v450 = vadd.f32 %v438, %v342
        %452 = vset.pattern.permute.xlu0 0
        %453 = vperm.xlu0 %452, %v268
        %v454 = vpop.permute.xlu0 %453
        %v456 = vmul.f32 %v284, %v454
        %v457 = vmul.f32 %v285, %v454
        %v458 = vmul.f32 %v286, %v454
        %vm459 = vcmask 523264
        %v460 = vsel %vm459, %v456, 0.0
        %v461 = vrot.slane %v460, 4
        %v462 = vadd.f32 %v460, %v461
        %v463 = vrot.slane %v462, 2
        %v464 = vadd.f32 %v462, %v463
        %v465 = vrot.slane %v464, 1
        %v466 = vadd.f32 %v464, %v465
        %v467 = vsel %vm459, %v457, 0.0
        %v468 = vrot.slane %v467, 4
        %v469 = vadd.f32 %v467, %v468
        %v470 = vrot.slane %v469, 2
        %v471 = vadd.f32 %v469, %v470
        %v472 = vrot.slane %v471, 1
        %v473 = vadd.f32 %v471, %v472
        %v474 = vsel %vm459, %v458, 0.0
        %v475 = vrot.slane %v474, 4
        %v476 = vadd.f32 %v474, %v475
        %v477 = vrot.slane %v476, 2
        %v478 = vadd.f32 %v476, %v477
        %v479 = vrot.slane %v478, 1
        %v480 = vadd.f32 %v478, %v479
        %v481 = vstv %s266
        %v482 = vadd.f32 %v466, %v481
        %v483 = vadd.f32 %v473, %v481
        %v484 = vadd.f32 %v480, %v481
        %488 = vrot.lane.b32.xlu0 %v482, 64
        %v489 = vpop.permute.xlu0 %488
        %490 = vrot.lane.b32.xlu0 %v483, 64
        %v491 = vpop.permute.xlu0 %490
        %492 = vrot.lane.b32.xlu0 %v484, 64
        %v493 = vpop.permute.xlu0 %492
        %v497 = vsel %vm459, %v482, %v489
        %v498 = vsel %vm459, %v483, %v491
        %v499 = vsel %vm459, %v484, %v493
        %v500 = vsel %vm271, 1, 0
        %vm501 = vcmp.eq.s32.totalorder %v500, 1
        %v502 = vsel %vm501, %v343, %v439
        %v503 = vsel %vm501, %v344, %v440
        %v504 = vsel %vm501, %v345, %v441
        %v505 = vsel %vm501, %v346, %v442
        %v506 = vsel %vm501, %v347, %v443
        %v507 = vsel %vm501, %v348, %v444
        %v508 = vsel %vm501, %v349, %v445
        %v509 = vsel %vm501, %v350, %v446
        %v510 = vsel %vm501, %v351, %v447
        %v511 = vsel %vm501, %v352, %v448
        %v512 = vsel %vm501, %v353, %v449
        %v513 = vsel %vm501, %v354, %v450
        %v514 = vlaneseq
        %v515 = vshrl.u32 %v514, 7
        %v516 = vsub.s32 0, %v515
        %v517 = vrot.slane %v497, %v516
        %v518 = vlaneseq
        %v519 = vshrl.u32 %v518, 7
        %v520 = vsub.s32 0, %v519
        %v521 = vrot.slane %v498, %v520
        %v522 = vlaneseq
        %v523 = vshrl.u32 %v522, 7
        %v524 = vsub.s32 0, %v523
        %v525 = vrot.slane %v499, %v524
        %v526 = vmul.f32 %v502, %v517
        %v527 = vmul.f32 %v503, %v517
        %v528 = vmul.f32 %v504, %v517
        %v529 = vmul.f32 %v505, %v517
        %v530 = vmul.f32 %v506, %v521
        %v531 = vmul.f32 %v507, %v521
        %v532 = vmul.f32 %v508, %v521
        %v533 = vmul.f32 %v509, %v521
        %v534 = vmul.f32 %v510, %v525
        %v535 = vmul.f32 %v511, %v525
        %v536 = vmul.f32 %v512, %v525
        %v537 = vmul.f32 %v513, %v525
        %538 = vst [vmem:[%s250] sm:$0xff] %v526
        %539 = vst [vmem:[%s250 + $0x8] sm:$0xff] %v527
        %540 = vst [vmem:[%s250 + $0x10] sm:$0xff] %v528
        %541 = vst [vmem:[%s250 + $0x18] sm:$0xff] %v529
        %542 = vst [vmem:[%s250 + $0x20] sm:$0xff] %v530
        %543 = vst [vmem:[%s250 + $0x28] sm:$0xff] %v531
        %544 = vst [vmem:[%s250 + $0x30] sm:$0xff] %v532
        %545 = vst [vmem:[%s250 + $0x38] sm:$0xff] %v533
        %546 = vst [vmem:[%s250 + $0x40] sm:$0xff] %v534
        %547 = vst [vmem:[%s250 + $0x48] sm:$0xff] %v535
        %548 = vst [vmem:[%s250 + $0x50] sm:$0xff] %v536
        %549 = vst [vmem:[%s250 + $0x58] sm:$0xff] %v537
        %s550 = sand.u32 %s143, 1
        %s551 = scalar_lea.sflag [#allocation3], %s550
        %s552 = sand.u32 %s143, 1
        %s553 = smul.addr %s552, 96
        %s554 = scalar_lea.vmem [#allocation5], %s553
        // Predicated region
        $region45: #{tpu_custom_call.1} parent=39 // pred_check
          %p555 = pneg %p153
        $region46: #{tpu_custom_call.1} parent=39 // pred_check_branch
          %557 = sbr.rel (%p555) target = $region48
        $region47: #{tpu_custom_call.1} parent=39 // pred_region
          %s558 = smul.u32 3, %s20
          %s560 = ssub.s32 1536, 1536
          %561 = vsyncadd %s551, %s560
          %s562 = smul.addr %s558, 4
          %s563 = smul.addr %s562, 128
          %s564 = scalar_lea.hbm %s5, %s563
          %s565 = sshll.u32 %s554, 4
          %s566 = int_to_ptr.vmem [resolvable:$true] %s565
          %571 = dma.vmem_to_hbm [thread:$0]  %s566, 1536, %s564, %s551, 128, 128, 8
        $region48: #{tpu_custom_call.1} parent=39 // pred_fallthru
          _
      $region40: #{tpu_custom_call.1} parent=5 // pred_fallthru
        _
      %p572 = scmp.le.s32.totalorder 2, %s15
      // Predicated region
      $region49: #{tpu_custom_call.1} parent=5 // pred_check
        %p573 = pneg %p572
      $region50: #{tpu_custom_call.1} parent=5 // pred_check_branch
        %575 = sbr.rel (%p573) target = $region52
      $region51: #{tpu_custom_call.1} parent=5 // pred_region
        %s576 = ssub.s32 %s15, 2
        // Predicated region
        $region53: #{tpu_custom_call.1} parent=51 // pred_check
          %p577 = pneg %p159
        $region54: #{tpu_custom_call.1} parent=51 // pred_check_branch
          %579 = sbr.rel (%p577) target = $region56
        $region55: #{tpu_custom_call.1} parent=51 // pred_region
          %s580 = sand.u32 %s144, 1
          %s581 = scalar_lea.sflag [#allocation3], %s580
          %s582 = sand.u32 %s144, 1
          %s583 = smul.addr %s582, 96
          %s584 = scalar_lea.vmem [#allocation5], %s583
          %585 = dma.done %s581, 1536
        $region56: #{tpu_custom_call.1} parent=51 // pred_fallthru
          _
      $region52: #{tpu_custom_call.1} parent=5 // pred_fallthru
        _
    $region6: #{tpu_custom_call.1} parent=1 // loop_footer
      %s19 = sadd.s32 1, %s15
    $region7: #{tpu_custom_call.1} parent=1 // loop_footer_branch
      %14 = sbr.rel target = $region3
    $region8: #{tpu_custom_call.1} parent=1 // loop_exit
      _
    %586 = vsyncpa [#allocation3], 1
    %s587 = scalar_lea.sflag [#allocation3], 1
    %588 = vsyncpa %s587, 1
    %589 = vsyncpa [#allocation4], 1
    %s590 = scalar_lea.sflag [#allocation4], 1
    %591 = vsyncpa %s590, 1

</llo_original>
